<compile_context>
chip_gen: v6e
topology: v6e:2x2x1
jax: 0.10.0
libtpu: 0.0.40
codegen_flags: <defaults>
</compile_context>

<pallas_src>
import jax
import jax.numpy as jnp
import numpy as np
from jax.experimental import pallas as pl
from jax.experimental.pallas import tpu as pltpu


# ----------------------- pltpu.roll direction probe --------------------------

_ROLL_JNP_LIKE = None


def _roll_matches_jnp():
    """One-time probe: does pltpu.roll use jnp.roll's shift direction?"""
    global _ROLL_JNP_LIKE
    if _ROLL_JNP_LIKE is None:
        def k(x_ref, o_ref):
            o_ref[...] = pltpu.roll(x_ref[...], 1, axis=1)

        x = jnp.arange(8 * 128, dtype=jnp.float32).reshape(8, 128)
        y = pl.pallas_call(
            k, out_shape=jax.ShapeDtypeStruct((8, 128), jnp.float32))(x)
        _ROLL_JNP_LIKE = bool(jnp.array_equal(y, jnp.roll(x, 1, axis=1)))
    return _ROLL_JNP_LIKE


# ----------------------------- fused kernel ----------------------------------


def _make_up_kernel(H, W, Chalf, roll_jnp_like):
    """Builds the fused Up-block kernel (one batch element per grid step)."""
    W2 = 2 * W
    P = 4 * H * W                      # hi-res flat spatial size (lane dim)

    def rot(v, s):
        # Lane rotation on the XLU.  `s` follows jnp.roll semantics
        # (element i -> i + s); flipped if the hardware convention differs.
        n = v.shape[-1]
        s = s % n
        if s == 0:
            return v
        if not roll_jnp_like:
            s = (n - s) % n
        return pltpu.roll(v, s, axis=1)

    def kernel(x1_ref, x2_ref, wall_ref, upb_ref, ym_ref, xm_ref, cm_ref,
               w1_ref, sh1_ref, w2_ref, sh2_ref, o_ref):
        # ---- ConvTranspose2d(Cin, Chalf, k=2, s=2): one fused 4-tap matmul ---
        # x1 arrives zero-padded to P lanes, so u is already on a P-wide
        # canvas with the low-res image in lanes [0, H*W).
        u = jnp.dot(wall_ref[...], x1_ref[0],
                    preferred_element_type=jnp.float32)          # (4*Chalf, P)

        # ---- 2x2 interleave via lane rotations + tiny 0/1 masks --------------
        ym = ym_ref[...]                                         # (H, P)
        xm = xm_ref[...]                                         # (W, P)

        # (a) spread the H row-chunks of width W to stride-4W positions
        s1 = u * ym[0:1]
        for y in range(1, H):
            s1 = s1 + rot(u, 3 * y * W) * ym[y:y + 1]
        # (b) inside each 4W block, move element x to lane 2x
        s2 = s1 * xm[0:1]
        for x in range(1, W):
            s2 = s2 + rot(s1, x) * xm[x:x + 1]
        # (c) merge the 4 taps at their (kh, kw) lane offsets, add bias.
        #     Result is exactly the NCHW-flat layout of the upsampled image.
        x1_up = (s2[0 * Chalf:1 * Chalf]
                 + rot(s2[1 * Chalf:2 * Chalf], 1)
                 + rot(s2[2 * Chalf:3 * Chalf], W2)
                 + rot(s2[3 * Chalf:4 * Chalf], W2 + 1)
                 + upb_ref[...])                                 # (Chalf, P)

        # ---- torch.cat([x2, x1_up], dim=1): channels are sublanes ------------
        xcat = jnp.concatenate([x2_ref[0], x1_up], axis=0)       # (Cin, P)

        cm = cm_ref[...]                                         # (9, P)

        def conv3x3_bn_relu(xin, w_ref_, sh_ref_):
            # im2col via XLU lane shifts + precomputed zero-padding masks,
            # then ONE K = 9*C matmul (BN scale folded into the weights).
            patches = []
            for t in range(9):
                dy, dx = t // 3, t % 3
                s = (dy - 1) * W2 + (dx - 1)
                v = rot(xin, -s)
                patches.append(v * cm[t:t + 1])
            pmat = jnp.concatenate(patches, axis=0)              # (9*C, P)
            y = jnp.dot(w_ref_[...], pmat,
                        preferred_element_type=jnp.float32) + sh_ref_[...]
            return jnp.maximum(y, 0.0)                           # (Cout, P)

        h = conv3x3_bn_relu(xcat, w1_ref, sh1_ref)
        o_ref[0] = conv3x3_bn_relu(h, w2_ref, sh2_ref)

    return kernel


# ----------------------------- trace-time constants ---------------------------


def _upsample_masks(H, W):
    """0/1 masks for the y-spread and x-spread interleave steps."""
    P = 4 * H * W
    ym = np.zeros((H, P), np.float32)
    for y in range(H):
        ym[y, 4 * y * W: 4 * y * W + W] = 1.0
    lane = np.arange(P)
    xm = np.zeros((W, P), np.float32)
    for x in range(W):
        xm[x] = ((lane % (4 * W)) == 2 * x).astype(np.float32)
    return jnp.asarray(ym), jnp.asarray(xm)


def _conv_masks(H2, W2):
    """0/1 masks implementing the 3x3 'same' zero padding for both convs."""
    P = H2 * W2
    lane = np.arange(P)
    yy, xx = lane // W2, lane % W2
    cm = np.zeros((9, P), np.float32)
    for dy in range(3):
        for dx in range(3):
            sy, sx = dy - 1, dx - 1
            ok = ((yy + sy >= 0) & (yy + sy < H2) &
                  (xx + sx >= 0) & (xx + sx < W2))
            cm[dy * 3 + dx] = ok.astype(np.float32)
    return jnp.asarray(cm)


# ----------------------------- wrapper ----------------------------------------


def up_forward(x1_nchw, x2_nchw, p, eps=1e-5):
    """Forward of `Up`: inputs/outputs in NCHW, exactly like PyTorch."""
    x1 = x1_nchw.astype(jnp.float32)
    x2 = x2_nchw.astype(jnp.float32)
    N, Cin, H, W = x1.shape
    Chalf = Cin // 2
    Cout = p["c1_w"].shape[0]
    H2, W2 = 2 * H, 2 * W
    Q, P = H * W, H2 * W2
    assert x2.shape == (N, Chalf, H2, W2)

    # Flat-spatial, channels-first views.  x1 is zero-padded to P lanes so the
    # fused transpose-conv matmul works on a lane-dense, P-wide canvas.
    x1_pad = jnp.pad(x1.reshape(N, Cin, Q), ((0, 0), (0, 0), (0, P - Q)))
    x2_flat = x2.reshape(N, Chalf, P)

    # ConvTranspose2d weight [Cin, Chalf, 2, 2] -> (4*Chalf, Cin), tap-major.
    wall = jnp.transpose(p["up_w"], (2, 3, 1, 0)).reshape(4 * Chalf, Cin)
    upb = p["up_b"].reshape(Chalf, 1)

    ymask, xmask = _upsample_masks(H, W)       # (H, P), (W, P) constants
    cmask = _conv_masks(H2, W2)                # (9, P) constant

    def fold_bn(w_oihw, g, b, m, v):
        # Conv2d(3x3, bias=False) + BatchNorm2d(eval): fold the BN scale into
        # the conv weights; the kernel only adds the per-channel shift.
        scale = g / jnp.sqrt(v + eps)
        w_cf = jnp.transpose(w_oihw, (0, 2, 3, 1)).reshape(w_oihw.shape[0], -1)
        return w_cf * scale[:, None], (b - m * scale).reshape(-1, 1)

    w1s, sh1 = fold_bn(p["c1_w"], p["bn1_g"], p["bn1_b"], p["bn1_m"], p["bn1_v"])
    w2s, sh2 = fold_bn(p["c2_w"], p["bn2_g"], p["bn2_b"], p["bn2_m"], p["bn2_v"])

    kernel = _make_up_kernel(H, W, Chalf, _roll_matches_jnp())

    def const2d(shape):
        return pl.BlockSpec(shape, lambda n: (0, 0))

    out = pl.pallas_call(
        kernel,
        grid=(N,),
        in_specs=[
            pl.BlockSpec((1, Cin, P), lambda n: (n, 0, 0)),     # x1 (padded)
            pl.BlockSpec((1, Chalf, P), lambda n: (n, 0, 0)),   # x2 (flat)
            const2d((4 * Chalf, Cin)),                          # fused up weights
            const2d((Chalf, 1)),                                # up bias
            const2d((H, P)),                                    # y-spread masks
            const2d((W, P)),                                    # x-spread masks
            const2d((9, P)),                                    # conv pad masks
            const2d((Cout, 9 * Cin)),                           # conv1 (BN-scaled)
            const2d((Cout, 1)),                                 # bn1 shift
            const2d((Cout, 9 * Cout)),                          # conv2 (BN-scaled)
            const2d((Cout, 1)),                                 # bn2 shift
        ],
        out_specs=pl.BlockSpec((1, Cout, P), lambda n: (n, 0, 0)),
        out_shape=jax.ShapeDtypeStruct((N, Cout, P), jnp.float32),
        compiler_params=pltpu.CompilerParams(
            dimension_semantics=("parallel",)),   # batch -> 2nd TC on v7x
    )(x1_pad, x2_flat, wall, upb, ymask, xmask, cmask, w1s, sh1, w2s, sh2)

    return out.reshape(N, Cout, H2, W2)            # already NCHW (free reshape)


# ----------------------------- reference (pure JAX) ---------------------------


def up_reference(x1_nchw, x2_nchw, p, eps=1e-5):
    x1 = jnp.transpose(x1_nchw, (0, 2, 3, 1)).astype(jnp.float32)
    x2 = jnp.transpose(x2_nchw, (0, 2, 3, 1)).astype(jnp.float32)
    N, H, W, Cin = x1.shape
    Chalf = Cin // 2
    y = jnp.einsum("nhwi,iokl->nhkwlo", x1, p["up_w"])
    y = y.reshape(N, 2 * H, 2 * W, Chalf) + p["up_b"]
    x = jnp.concatenate([x2, y], axis=-1)

    def block(x, w, g, b, m, v):
        out = jax.lax.conv_general_dilated(
            x, jnp.transpose(w, (2, 3, 1, 0)),
            window_strides=(1, 1), padding="SAME",
            dimension_numbers=("NHWC", "HWIO", "NHWC"))
        out = (out - m) / jnp.sqrt(v + eps) * g + b
        return jnp.maximum(out, 0.0)

    x = block(x, p["c1_w"], p["bn1_g"], p["bn1_b"], p["bn1_m"], p["bn1_v"])
    x = block(x, p["c2_w"], p["bn2_g"], p["bn2_b"], p["bn2_m"], p["bn2_v"])
    return jnp.transpose(x, (0, 3, 1, 2))


# ----------------------------- main -------------------------------------------


if __name__ == "__main__":
    # Shapes: in_channels=8, out_channels=8
    #   x1: [N, Cin,    H,  W ] = [2, 8,  8,  8]
    #   x2: [N, Cin//2, 2H, 2W] = [2, 4, 16, 16]
    N, Cin, H, W = 2, 8, 8, 8
    Cout = 8
    Chalf = Cin // 2

    key = jax.random.PRNGKey(0)
    k = jax.random.split(key, 16)

    x1 = jax.random.normal(k[0], (N, Cin, H, W), jnp.float32)
    x2 = jax.random.normal(k[1], (N, Chalf, 2 * H, 2 * W), jnp.float32)

    params = {
        # ConvTranspose2d weight [Cin, Chalf, 2, 2], bias [Chalf]
        "up_w": 0.1 * jax.random.normal(k[2], (Cin, Chalf, 2, 2), jnp.float32),
        "up_b": 0.1 * jax.random.normal(k[3], (Chalf,), jnp.float32),
        # DoubleConv conv weights (OIHW), bias=False
        "c1_w": 0.1 * jax.random.normal(k[4], (Cout, Cin, 3, 3), jnp.float32),
        "c2_w": 0.1 * jax.random.normal(k[5], (Cout, Cout, 3, 3), jnp.float32),
        # BatchNorm2d (eval mode) with non-trivial running stats to exercise
        # the BN-into-weights folding.
        "bn1_g": 1.0 + 0.1 * jax.random.normal(k[6], (Cout,), jnp.float32),
        "bn1_b": 0.1 * jax.random.normal(k[7], (Cout,), jnp.float32),
        "bn1_m": 0.1 * jax.random.normal(k[8], (Cout,), jnp.float32),
        "bn1_v": jax.random.uniform(k[9], (Cout,), jnp.float32, 0.5, 1.5),
        "bn2_g": 1.0 + 0.1 * jax.random.normal(k[10], (Cout,), jnp.float32),
        "bn2_b": 0.1 * jax.random.normal(k[11], (Cout,), jnp.float32),
        "bn2_m": 0.1 * jax.random.normal(k[12], (Cout,), jnp.float32),
        "bn2_v": jax.random.uniform(k[13], (Cout,), jnp.float32, 0.5, 1.5),
    }

    out = jax.block_until_ready(up_forward(x1, x2, params))
    ref = jax.block_until_ready(up_reference(x1, x2, params))

    np.testing.assert_allclose(np.asarray(out), np.asarray(ref),
                               rtol=1e-4, atol=1e-4)
    assert out.shape == (N, Cout, 2 * H, 2 * W)

    print("KERNEL_OK")
</pallas_src>

<mosaic_0001>
module attributes {stable_mosaic.version = 11 : i64} {
  func.func @k(%arg0: memref<8x128xf32, #tpu.memory_space<vmem>>, %arg1: memref<8x128xf32, #tpu.memory_space<vmem>>) attributes {dimension_semantics = [], scalar_prefetch = 0 : i64, scratch_operands = 0 : i64, tpu.core_type = #tpu.core_type<tc>} {
    %c0 = arith.constant 0 : index
    %c0_0 = arith.constant 0 : index
    %0 = vector.load %arg0[%c0, %c0_0] : memref<8x128xf32, #tpu.memory_space<vmem>>, vector<8x128xf32>
    %c1_i32 = arith.constant 1 : i32
    %1 = tpu.dynamic_rotate %0 by %c1_i32 dim 1 : vector<8x128xf32>, i32 -> vector<8x128xf32>
    %c0_1 = arith.constant 0 : index
    %c0_2 = arith.constant 0 : index
    %2 = vector.load %arg1[%c0_1, %c0_2] : memref<8x128xf32, #tpu.memory_space<vmem>>, vector<8x128xf32>
    tpu.vector_store %arg1[%c0_1, %c0_2], %1 {strides = array<i32>} : memref<8x128xf32, #tpu.memory_space<vmem>>, vector<8x128xf32>,
    return
  }
}

</mosaic_0001>

<llo_original>
// kernel: tpu_custom_call.1
$region0: #{tpu_custom_call.1}
  #allocation0 [shape = 'u32[]', space=smem, size = 0x4, offset = 0x4, fixed_abs, tag = 'smem constant byte address 0x4 - core index']
  #allocation1 [shape = 'u32[144,128]{1,0:T(1,128)}', space=vmem, size = 0x12000, scoped, tag = 'internal scratch']
  %s0 = inlined_call_operand.hbm [shape: f32[8,128], index: 0, kind: input, shape index: {}]
  %s1 = inlined_call_operand.hbm [shape: f32[8,128], index: 1, kind: output, shape index: {}]
  %s2 = sld [smem:[#allocation0]]
  $region18: #{tpu_custom_call.1} parent=0
    _
  %s4 = ssub.s32 1, %s2
  %s5 = scalar_select 0, %s4, %s2
  $region1: #{tpu_custom_call.1} parent=0
    #allocation2 [shape = 'u8[4096]{0}', space=vmem, size = 0x1000, scoped, tag = 'input window, operand 0, single buffered']
    #allocation3 [shape = 's32[1]{0}', space=sflag, size = 0x4, scoped, tag = 'scoped memory for tpu_custom_call.1']
    #allocation4 [shape = 's32[1]{0}', space=sflag, size = 0x4, scoped, tag = 'scoped memory for tpu_custom_call.1']
    #allocation5 [shape = 'u8[4096]{0}', space=vmem, size = 0x1000, scoped, tag = 'output window, operand 0, single buffered']
    %6 = vsyncpa [#allocation3], 0
    %7 = vsyncpa [#allocation4], 0
    // Predicated region
    $region2: #{tpu_custom_call.1} parent=1 // pred_check
      _
    $region3: #{tpu_custom_call.1} parent=1 // pred_check_branch
      %9 = sbr.rel (0) target = $region5
    $region4: #{tpu_custom_call.1} parent=1 // pred_region
      %s11 = ssub.s32 128, 128
      %12 = vsyncadd [#allocation3], %s11
      %s14 = sshll.u32 [#allocation2], 4
      %s15 = int_to_ptr.vmem [resolvable:$true] %s14
      %17 = dma.hbm_to_vmem [thread:$0]  %s0, 128, %s15, [#allocation3]
    $region5: #{tpu_custom_call.1} parent=1 // pred_fallthru
      _
    // Predicated region
    $region6: #{tpu_custom_call.1} parent=1 // pred_check
      _
    $region7: #{tpu_custom_call.1} parent=1 // pred_check_branch
      %19 = sbr.rel (0) target = $region9
    $region8: #{tpu_custom_call.1} parent=1 // pred_region
      %20 = dma.done [#allocation3], 128
    $region9: #{tpu_custom_call.1} parent=1 // pred_fallthru
      _
    %v21 = vld [vmem:[#allocation2] sm:$0xff]
    %22 = vrot.lane.b32.xlu0 %v21, 1
    %v23 = vpop.permute.xlu0 %22
    %24 = vst [vmem:[#allocation5] sm:$0xff] %v23
    // Predicated region
    $region10: #{tpu_custom_call.1} parent=1 // pred_check
      _
    $region11: #{tpu_custom_call.1} parent=1 // pred_check_branch
      %26 = sbr.rel (0) target = $region13
    $region12: #{tpu_custom_call.1} parent=1 // pred_region
      %s28 = ssub.s32 128, 128
      %29 = vsyncadd [#allocation4], %s28
      %s31 = sshll.u32 [#allocation5], 4
      %s32 = int_to_ptr.vmem [resolvable:$true] %s31
      %34 = dma.vmem_to_hbm [thread:$0]  %s32, 128, %s1, [#allocation4]
    $region13: #{tpu_custom_call.1} parent=1 // pred_fallthru
      _
    // Predicated region
    $region14: #{tpu_custom_call.1} parent=1 // pred_check
      _
    $region15: #{tpu_custom_call.1} parent=1 // pred_check_branch
      %36 = sbr.rel (0) target = $region17
    $region16: #{tpu_custom_call.1} parent=1 // pred_region
      %37 = dma.done [#allocation4], 128
    $region17: #{tpu_custom_call.1} parent=1 // pred_fallthru
      _
    %38 = vsyncpa [#allocation3], 1
    %39 = vsyncpa [#allocation4], 1

</llo_original>
